<compile_context>
chip_gen: v5e
topology: v5e:2x2
jax: 0.10.0
libtpu: 0.0.40
codegen_flags: <defaults>
</compile_context>

<pallas_src>
import jax
import jax.numpy as jnp
from jax.experimental import pallas as pl
from jax.experimental.pallas import tpu as pltpu


def _convblock_mm_kernel(w_ref, b_ref, p_ref, o_ref):
    """One lane-dense output tile of  Swish( W_folded @ patches + b_folded ).

    w_ref: (C_out, K)   BN-folded conv weights (resident across the grid)
    b_ref: (C_out, 1)   BN-folded bias
    p_ref: (K, TM)      im2col patches tile
    o_ref: (C_out, TM)  activated output tile
    """
    acc = jnp.dot(w_ref[...], p_ref[...], preferred_element_type=jnp.float32)
    acc = acc + b_ref[...]                      # broadcast over the lane axis
    sig = 1.0 / (1.0 + jnp.exp(-acc))           # Swish / SiLU: x * sigmoid(x)
    o_ref[...] = (acc * sig).astype(o_ref.dtype)


def _im2col(x, kh, kw, stride, padding):
    """NCHW input -> (C_in*KH*KW, N*OH*OW) patch matrix (C, KH, KW major order,
    matching PyTorch's (C_out, C_in, KH, KW) weight flattening)."""
    n, c, h, w = x.shape
    xp = jnp.pad(x, ((0, 0), (0, 0), (padding, padding), (padding, padding)))
    oh = (h + 2 * padding - kh) // stride + 1
    ow = (w + 2 * padding - kw) // stride + 1
    cols = []
    for i in range(kh):
        for j in range(kw):
            cols.append(xp[:, :, i:i + stride * oh:stride, j:j + stride * ow:stride])
    p = jnp.stack(cols, axis=0).reshape(kh, kw, n, c, oh, ow)
    p = p.transpose(3, 0, 1, 2, 4, 5).reshape(c * kh * kw, n * oh * ow)
    return p, oh, ow


def conv_block(x, w, b, gamma, beta, running_mean, running_var, *,
               stride=1, padding=0, eps=1e-3, tm=256):
    """Pallas equivalent of ConvBlock.forward: Swish(BN(Conv2d(x)))."""
    n, c_in, h, w_sp = x.shape
    c_out, _, kh, kw = w.shape
    k = c_in * kh * kw

    # ---- Fold eval-mode BN into the conv weight/bias (wrapper-side) --------
    scale = gamma / jnp.sqrt(running_var + eps)                      # (C_out,)
    w_f = (w * scale[:, None, None, None]).reshape(c_out, k)         # (C_out, K)
    b_f = (scale * (b - running_mean) + beta).reshape(c_out, 1)      # (C_out, 1)

    # ---- im2col: layout plumbing in the wrapper, MXU work in the kernel ----
    patches, oh, ow = _im2col(x, kh, kw, stride, padding)            # (K, M)
    m = n * oh * ow

    # ---- Lane-dense tiling over the flattened output-pixel axis ------------
    tm_eff = max(128, min(tm, pl.next_power_of_2(m)))
    m_pad = pl.cdiv(m, tm_eff) * tm_eff
    if m_pad != m:
        patches = jnp.pad(patches, ((0, 0), (0, m_pad - m)))

    out = pl.pallas_call(
        _convblock_mm_kernel,
        out_shape=jax.ShapeDtypeStruct((c_out, m_pad), x.dtype),
        grid_spec=pltpu.PrefetchScalarGridSpec(
            num_scalar_prefetch=0,
            grid=(m_pad // tm_eff,),
            in_specs=[
                pl.BlockSpec((c_out, k), lambda i: (0, 0)),     # folded weights
                pl.BlockSpec((c_out, 1), lambda i: (0, 0)),     # folded bias
                pl.BlockSpec((k, tm_eff), lambda i: (0, i)),    # patches tile
            ],
            out_specs=pl.BlockSpec((c_out, tm_eff), lambda i: (0, i)),
        ),
        compiler_params=pltpu.CompilerParams(
            dimension_semantics=("parallel",),
        ),
    )(w_f.astype(x.dtype), b_f.astype(x.dtype), patches)

    # Back to PyTorch's NCHW layout (metadata-ish reshape/transpose in JAX).
    out = out[:, :m].reshape(c_out, n, oh, ow).transpose(1, 0, 2, 3)
    return out


if __name__ == "__main__":
    key = jax.random.PRNGKey(0)
    k_x, k_w, k_b, k_g, k_be, k_m, k_v = jax.random.split(key, 7)

    # Small shapes consistent with the module: Conv2d(4 -> 8, k=3, pad=1) on 16x16.
    N, C_IN, C_OUT, H, W = 2, 4, 8, 16, 16
    KH = KW = 3
    STRIDE, PADDING, EPS = 1, 1, 1e-3

    x = jax.random.normal(k_x, (N, C_IN, H, W), dtype=jnp.float32)
    w = jax.random.normal(k_w, (C_OUT, C_IN, KH, KW), dtype=jnp.float32) * 0.1
    b = jax.random.normal(k_b, (C_OUT,), dtype=jnp.float32) * 0.1
    gamma = jax.random.uniform(k_g, (C_OUT,), minval=0.5, maxval=1.5, dtype=jnp.float32)
    beta = jax.random.normal(k_be, (C_OUT,), dtype=jnp.float32) * 0.1
    running_mean = jax.random.normal(k_m, (C_OUT,), dtype=jnp.float32) * 0.1
    running_var = jax.random.uniform(k_v, (C_OUT,), minval=0.5, maxval=1.5, dtype=jnp.float32)

    y = conv_block(x, w, b, gamma, beta, running_mean, running_var,
                   stride=STRIDE, padding=PADDING, eps=EPS)
    jax.block_until_ready(y)

    # ---- Pure-JAX reference: Conv2d -> BatchNorm2d (eval) -> Swish ---------
    y_conv = jax.lax.conv_general_dilated(
        x, w, window_strides=(STRIDE, STRIDE),
        padding=[(PADDING, PADDING), (PADDING, PADDING)],
        dimension_numbers=("NCHW", "OIHW", "NCHW"),
    ) + b[None, :, None, None]
    y_bn = (gamma[None, :, None, None]
            * (y_conv - running_mean[None, :, None, None])
            / jnp.sqrt(running_var[None, :, None, None] + EPS)
            + beta[None, :, None, None])
    y_ref = y_bn * jax.nn.sigmoid(y_bn)

    assert y.shape == (N, C_OUT, H, W), y.shape
    assert y.dtype == x.dtype
    assert jnp.allclose(y, y_ref, atol=1e-4, rtol=1e-4), (
        float(jnp.max(jnp.abs(y - y_ref))))

    print("KERNEL_OK")
</pallas_src>

<mosaic_0001>
module attributes {stable_mosaic.version = 11 : i64} {
  func.func @_convblock_mm_kernel(%arg0: i32, %arg1: memref<8x36xf32, #tpu.memory_space<vmem>>, %arg2: memref<8x1xf32, #tpu.memory_space<vmem>>, %arg3: memref<36x256xf32, #tpu.memory_space<vmem>>, %arg4: memref<8x256xf32, #tpu.memory_space<vmem>>) attributes {dimension_semantics = [#tpu.dimension_semantics<parallel>], iteration_bounds = array<i64: 2>, scalar_prefetch = 0 : i64, scratch_operands = 0 : i64, tpu.core_type = #tpu.core_type<tc>, window_params = [{pipeline_mode = #tpu.pipeline_mode<synchronous>, transform_indices = @transform_0, window_bounds = array<i64: 8, 36>}, {pipeline_mode = #tpu.pipeline_mode<synchronous>, transform_indices = @transform_1, window_bounds = array<i64: 8, 1>}, {transform_indices = @transform_2, window_bounds = array<i64: 36, 256>}, {transform_indices = @transform_3, window_bounds = array<i64: 8, 256>}]} {
    %c0 = arith.constant 0 : index
    %c0_0 = arith.constant 0 : index
    %0 = vector.load %arg1[%c0, %c0_0] : memref<8x36xf32, #tpu.memory_space<vmem>>, vector<8x36xf32>
    %c0_1 = arith.constant 0 : index
    %c0_2 = arith.constant 0 : index
    %1 = vector.load %arg3[%c0_1, %c0_2] : memref<36x256xf32, #tpu.memory_space<vmem>>, vector<36x256xf32>
    %cst = arith.constant dense<0.000000e+00> : vector<8x256xf32>
    %2 = tpu.matmul %0, %1, %cst {dimension_numbers = #tpu.dot_dimension_numbers<[1], [0], [0], [1], [0, 0, 1, 1], [], []>} : vector<8x36xf32>, vector<36x256xf32>, vector<8x256xf32> -> vector<8x256xf32>
    %c0_3 = arith.constant 0 : index
    %c0_4 = arith.constant 0 : index
    %3 = vector.load %arg2[%c0_3, %c0_4] : memref<8x1xf32, #tpu.memory_space<vmem>>, vector<8x1xf32>
    %4 = vector.broadcast %3 : vector<8x1xf32> to vector<8x256xf32>
    %5 = arith.addf %2, %4 : vector<8x256xf32>
    %cst_5 = arith.constant 0.000000e+00 : f32
    %6 = vector.broadcast %cst_5 : f32 to vector<8x256xf32>
    %7 = arith.subf %6, %5 : vector<8x256xf32>
    %8 = math.exp %7 : vector<8x256xf32>
    %cst_6 = arith.constant 1.000000e+00 : f32
    %9 = vector.broadcast %cst_6 : f32 to vector<8x256xf32>
    %10 = arith.addf %9, %8 : vector<8x256xf32>
    %cst_7 = arith.constant 1.000000e+00 : f32
    %11 = vector.broadcast %cst_7 : f32 to vector<8x256xf32>
    %12 = arith.divf %11, %10 : vector<8x256xf32>
    %13 = arith.mulf %5, %12 : vector<8x256xf32>
    %c0_8 = arith.constant 0 : index
    %c0_9 = arith.constant 0 : index
    %14 = vector.load %arg4[%c0_8, %c0_9] : memref<8x256xf32, #tpu.memory_space<vmem>>, vector<8x256xf32>
    tpu.vector_store %arg4[%c0_8, %c0_9], %13 {strides = array<i32>} : memref<8x256xf32, #tpu.memory_space<vmem>>, vector<8x256xf32>,
    return
  }
  func.func @transform_0(%arg0: i32) -> (i32, i32) {
    %c0_i32 = arith.constant 0 : i32
    %c0_i32_0 = arith.constant 0 : i32
    %c0_i32_1 = arith.constant 0 : i32
    return %c0_i32, %c0_i32_0 : i32, i32
  }
  func.func @transform_1(%arg0: i32) -> (i32, i32) {
    %c0_i32 = arith.constant 0 : i32
    %c0_i32_0 = arith.constant 0 : i32
    %c0_i32_1 = arith.constant 0 : i32
    return %c0_i32, %c0_i32_0 : i32, i32
  }
  func.func @transform_2(%arg0: i32) -> (i32, i32) {
    %c0_i32 = arith.constant 0 : i32
    %c0_i32_0 = arith.constant 0 : i32
    return %c0_i32, %arg0 : i32, i32
  }
  func.func @transform_3(%arg0: i32) -> (i32, i32) {
    %c0_i32 = arith.constant 0 : i32
    %c0_i32_0 = arith.constant 0 : i32
    return %c0_i32, %arg0 : i32, i32
  }
}

</mosaic_0001>

<llo_original>
// kernel: tpu_custom_call.1
$region0: #{tpu_custom_call.1}
  #allocation0 [shape = 'u32[]', space=smem, size = 0x4, offset = 0x4, fixed_abs, tag = 'smem constant byte address 0x4 - core index']
  #allocation1 [shape = 'u32[72,128]{1,0:T(1,128)}', space=vmem, size = 0x9000, scoped, tag = 'internal scratch']
  %s0 = inlined_call_operand.vmem [shape: f32[8,36], index: 0, kind: input, shape index: {}]
  %s1 = inlined_call_operand.vmem [shape: f32[8,1], index: 1, kind: input, shape index: {}]
  %s2 = inlined_call_operand.hbm [shape: f32[36,512], index: 2, kind: input, shape index: {}]
  %s3 = inlined_call_operand.hbm [shape: f32[8,512], index: 3, kind: output, shape index: {}]
  %s4 = sld [smem:[#allocation0]]
  $region49: #{tpu_custom_call.1} parent=0
    _
  %s6 = ssub.s32 1, %s4
  %s7 = scalar_select 0, %s6, %s4
  $region1: #{tpu_custom_call.1} parent=0
    #allocation2 [shape = 'u8[81920]{0}', space=vmem, size = 0x14000, scoped, tag = 'input window, operand 2']
    #allocation3 [shape = 's32[2]{0}', space=sflag, size = 0x8, scoped, tag = 'scoped memory for tpu_custom_call.1']
    #allocation4 [shape = 's32[2]{0}', space=sflag, size = 0x8, scoped, tag = 'scoped memory for tpu_custom_call.1']
    #allocation5 [shape = 'u8[16384]{0}', space=vmem, size = 0x4000, scoped, tag = 'output window, operand 0']
    %8 = vsyncpa [#allocation3], 0
    %s9 = scalar_lea.sflag [#allocation3], 1
    %10 = vsyncpa %s9, 0
    %11 = vsyncpa [#allocation4], 0
    %s12 = scalar_lea.sflag [#allocation4], 1
    %13 = vsyncpa %s12, 0
    loop: start=0, step=1, limit=4
    $region2: #{tpu_custom_call.1} parent=1 // loop_pre_header
      _
    $region3: #{tpu_custom_call.1} parent=1 // loop_header
      %s15 = sphi 0, %s19
      %p16 = scmp.ge.s32.totalorder %s15, 4
      %s23 = sphi 0, %s23
      %s25 = sphi 0, %s23
      %s26 = sphi 0, %s25
      %s40 = sphi 0, %s26
      %s44 = sphi 0, %s44
      %s46 = sphi 0, %s44
      %s47 = sphi 0, %s46
      %s61 = sphi 0, %s47
      %s67 = sphi 0, %s69
      %s70 = sphi 0, %s67
      %s71 = sphi 0, %s70
      %s87 = sphi 0, %s71
      %s93 = sphi 0, %s95
      %s96 = sphi 0, %s93
      %s97 = sphi 0, %s96
      %s113 = sphi 0, %s97
    $region4: #{tpu_custom_call.1} parent=1 // loop_header_branch
      %18 = sbr.rel (%p16) target = $region8
    $region5: #{tpu_custom_call.1} parent=1 // loop_body
      %s20 = ssub.s32 %s15, 1
      %s21 = ssub.s32 %s15, 2
      %s22 = sadd.s32 %s15, 1
      %s24 = sadd.s32 %s23, 1
      %p27 = scmp.eq.s32.totalorder %s15, 1
      %p28 = scmp.ne.s32.totalorder %s23, %s25
      %p29 = scmp.eq.s32.totalorder %s15, 0
      %p30 = por %p28, %p29
      %p31 = scmp.ne.s32.totalorder %s23, %s25
      %p32 = scmp.eq.s32.totalorder %s20, 1
      %p33 = por %p31, %p32
      %p34 = scmp.ne.s32.totalorder %s25, %s26
      %p35 = scmp.eq.s32.totalorder %s20, 0
      %p36 = por %p34, %p35
      %p37 = scmp.ne.s32.totalorder %s25, %s26
      %p38 = scmp.eq.s32.totalorder %s21, 1
      %p39 = por %p37, %p38
      %p41 = scmp.ne.s32.totalorder %s26, %s40
      %p42 = scmp.eq.s32.totalorder %s21, 0
      %p43 = por %p41, %p42
      %s45 = sadd.s32 %s44, 1
      %p48 = scmp.eq.s32.totalorder %s15, 1
      %p49 = scmp.ne.s32.totalorder %s44, %s46
      %p50 = scmp.eq.s32.totalorder %s15, 0
      %p51 = por %p49, %p50
      %p52 = scmp.ne.s32.totalorder %s44, %s46
      %p53 = scmp.eq.s32.totalorder %s20, 1
      %p54 = por %p52, %p53
      %p55 = scmp.ne.s32.totalorder %s46, %s47
      %p56 = scmp.eq.s32.totalorder %s20, 0
      %p57 = por %p55, %p56
      %p58 = scmp.ne.s32.totalorder %s46, %s47
      %p59 = scmp.eq.s32.totalorder %s21, 1
      %p60 = por %p58, %p59
      %p62 = scmp.ne.s32.totalorder %s47, %s61
      %p63 = scmp.eq.s32.totalorder %s21, 0
      %p64 = por %p62, %p63
      %s65 = ssub.s32 %s15, %s22
      %p66 = scmp.eq.s32.totalorder %s65, 0
      %s68 = sadd.s32 %s67, 1
      %s69 = scalar_select %p66, %s67, %s68
      %p72 = pneg %p66
      %p73 = scmp.eq.s32.totalorder %s15, 1
      %p74 = por %p72, %p73
      %p75 = scmp.ne.s32.totalorder %s67, %s70
      %p76 = scmp.eq.s32.totalorder %s15, 0
      %p77 = por %p75, %p76
      %p78 = scmp.ne.s32.totalorder %s67, %s70
      %p79 = scmp.eq.s32.totalorder %s20, 1
      %p80 = por %p78, %p79
      %p81 = scmp.ne.s32.totalorder %s70, %s71
      %p82 = scmp.eq.s32.totalorder %s20, 0
      %p83 = por %p81, %p82
      %p84 = scmp.ne.s32.totalorder %s70, %s71
      %p85 = scmp.eq.s32.totalorder %s21, 1
      %p86 = por %p84, %p85
      %p88 = scmp.ne.s32.totalorder %s71, %s87
      %p89 = scmp.eq.s32.totalorder %s21, 0
      %p90 = por %p88, %p89
      %s91 = ssub.s32 %s15, %s22
      %p92 = scmp.eq.s32.totalorder %s91, 0
      %s94 = sadd.s32 %s93, 1
      %s95 = scalar_select %p92, %s93, %s94
      %p98 = pneg %p92
      %p99 = scmp.eq.s32.totalorder %s15, 1
      %p100 = por %p98, %p99
      %p101 = scmp.ne.s32.totalorder %s93, %s96
      %p102 = scmp.eq.s32.totalorder %s15, 0
      %p103 = por %p101, %p102
      %p104 = scmp.ne.s32.totalorder %s93, %s96
      %p105 = scmp.eq.s32.totalorder %s20, 1
      %p106 = por %p104, %p105
      %p107 = scmp.ne.s32.totalorder %s96, %s97
      %p108 = scmp.eq.s32.totalorder %s20, 0
      %p109 = por %p107, %p108
      %p110 = scmp.ne.s32.totalorder %s96, %s97
      %p111 = scmp.eq.s32.totalorder %s21, 1
      %p112 = por %p110, %p111
      %p114 = scmp.ne.s32.totalorder %s97, %s113
      %p115 = scmp.eq.s32.totalorder %s21, 0
      %p116 = por %p114, %p115
      %p117 = scmp.le.s32.totalorder 1, %s15
      %p118 = scmp.lt.s32.totalorder %s15, 3
      %p119 = pnand %p117, %p118
      %p120 = pneg %p119
      // Predicated region
      $region9: #{tpu_custom_call.1} parent=5 // pred_check
        _
      $region10: #{tpu_custom_call.1} parent=5 // pred_check_branch
        %122 = sbr.rel (%p119) target = $region12
      $region11: #{tpu_custom_call.1} parent=5 // pred_region
        %s123 = ssub.s32 %s15, 1
        // Predicated region
        $region13: #{tpu_custom_call.1} parent=11 // pred_check
          %p124 = pneg %p36
        $region14: #{tpu_custom_call.1} parent=11 // pred_check_branch
          %126 = sbr.rel (%p124) target = $region16
        $region15: #{tpu_custom_call.1} parent=11 // pred_region
          _
        $region16: #{tpu_custom_call.1} parent=11 // pred_fallthru
          _
        // Predicated region
        $region17: #{tpu_custom_call.1} parent=11 // pred_check
          %p127 = pneg %p57
        $region18: #{tpu_custom_call.1} parent=11 // pred_check_branch
          %129 = sbr.rel (%p127) target = $region20
        $region19: #{tpu_custom_call.1} parent=11 // pred_region
          _
        $region20: #{tpu_custom_call.1} parent=11 // pred_fallthru
          _
      $region12: #{tpu_custom_call.1} parent=5 // pred_fallthru
        _
      %p130 = scmp.lt.s32.totalorder %s15, 2
      // Predicated region
      $region21: #{tpu_custom_call.1} parent=5 // pred_check
        %p131 = pneg %p130
      $region22: #{tpu_custom_call.1} parent=5 // pred_check_branch
        %133 = sbr.rel (%p131) target = $region24
      $region23: #{tpu_custom_call.1} parent=5 // pred_region
        // Predicated region
        $region25: #{tpu_custom_call.1} parent=23 // pred_check
          %p134 = pneg %p77
        $region26: #{tpu_custom_call.1} parent=23 // pred_check_branch
          %136 = sbr.rel (%p134) target = $region28
        $region27: #{tpu_custom_call.1} parent=23 // pred_region
          %s137 = sand.u32 %s67, 1
          %s138 = scalar_lea.sflag [#allocation3], %s137
          %s139 = sand.u32 %s67, 1
          %s140 = smul.addr %s139, 80
          %s141 = scalar_lea.vmem [#allocation2], %s140
          %s142 = smul.u32 2, %s15
          %144 = vsyncadd %s138, 0
          %s145 = smul.addr %s142, 8
          %s146 = scalar_lea.hbm %s2, %s145
          %s147 = sshll.u32 %s146, 4
          %s148 = int_to_ptr.hbm [resolvable:$true] %s147
          %s149 = sshll.u32 %s141, 4
          %s150 = int_to_ptr.vmem [resolvable:$true] %s149
          %155 = dma.hbm_to_vmem [thread:$0]  %s148, 1280, %s150, %s138, 512, 256, 16
        $region28: #{tpu_custom_call.1} parent=23 // pred_fallthru
          _
      $region24: #{tpu_custom_call.1} parent=5 // pred_fallthru
        _
      %p156 = scmp.le.s32.totalorder 1, %s15
      %p157 = scmp.lt.s32.totalorder %s15, 3
      %p158 = pnand %p156, %p157
      %p159 = pneg %p158
      // Predicated region
      $region29: #{tpu_custom_call.1} parent=5 // pred_check
        _
      $region30: #{tpu_custom_call.1} parent=5 // pred_check_branch
        %161 = sbr.rel (%p158) target = $region32
      $region31: #{tpu_custom_call.1} parent=5 // pred_region
        %s162 = ssub.s32 %s15, 1
        %s163 = sand.u32 %s70, 1
        %s164 = scalar_lea.sflag [#allocation3], %s163
        %s165 = sand.u32 %s70, 1
        %s166 = smul.addr %s165, 80
        %s167 = scalar_lea.vmem [#allocation2], %s166
        // Predicated region
        $region33: #{tpu_custom_call.1} parent=31 // pred_check
          %p168 = pneg %p83
        $region34: #{tpu_custom_call.1} parent=31 // pred_check_branch
          %170 = sbr.rel (%p168) target = $region36
        $region35: #{tpu_custom_call.1} parent=31 // pred_region
          %172 = dma.done %s164, 1280
        $region36: #{tpu_custom_call.1} parent=31 // pred_fallthru
          _
        %p173 = pneg %p36
        %p174 = pneg %p33
        %p175 = pneg %p57
        %p176 = pneg %p54
        %s177 = sand.u32 %s70, 1
        %s178 = scalar_lea.sflag [#allocation3], %s177
        %s179 = sand.u32 %s70, 1
        %s180 = smul.addr %s179, 80
        %s181 = scalar_lea.vmem [#allocation2], %s180
        %p182 = pneg %p83
        %p183 = pneg %p80
        %p184 = pneg %p109
        %p185 = pneg %p106
        %s186 = sand.u32 %s96, 1
        %s187 = scalar_lea.sflag [#allocation4], %s186
        %s188 = sand.u32 %s96, 1
        %s189 = smul.addr %s188, 16
        %s190 = scalar_lea.vmem [#allocation5], %s189
        %s191 = smul.u32 2, %s20
        %s192 = smul.u32 2, %s20
        %v193 = vld [vmem:[%s0] sm:$0xff]
        %v194 = vld [vmem:[%s167] sm:$0xff]
        %v195 = vld [vmem:[%s167 + $0x8] sm:$0xff]
        %v196 = vld [vmem:[%s167 + $0x10] sm:$0xff]
        %v197 = vld [vmem:[%s167 + $0x18] sm:$0xff]
        %v198 = vld [vmem:[%s167 + $0x20] sm:$0xff]
        %v199 = vld [vmem:[%s167 + $0x28] sm:$0xff]
        %v200 = vld [vmem:[%s167 + $0x30] sm:$0xff]
        %v201 = vld [vmem:[%s167 + $0x38] sm:$0xff]
        %v202 = vld [vmem:[%s167 + $0x40] sm:$0xf]
        %v203 = vld [vmem:[%s167 + $0x48] sm:$0xf]
        %v204 = vld [vmem:[%s1] sm:$0xff]
        %206 = vset.pattern.permute.xlu0 0
        %207 = vperm.xlu0 %206, %v204
        %v208 = vpop.permute.xlu0 %207
        %vm210 = vcmask 293888
        %v212 = vsel %vm210, %v193, 0
        %vm214 = vcmask 1043456
        %v216 = vsel %vm214, %v202, 0
        %v219 = vsel %vm214, %v203, 0
        %221 = vmatpush.msra.mxu0 0.0
        %222 = vmatpush.msra.mxu0 0.0
        %223 = vmatpush.msra.mxu0 0.0
        %224 = vmatpush.msra.mxu0 0.0
        %225 = vmatpush.msra.mxu0 0.0
        %226 = vmatpush.msra.mxu0 0.0
        %227 = vmatpush.msra.mxu0 0.0
        %228 = vmatpush.msra.mxu0 0.0
        %229 = vmatpush.msra.mxu0 0.0
        %230 = vmatpush.msra.mxu0 0.0
        %231 = vmatpush.msra.mxu0 0.0
        %232 = vmatpush.msra.mxu0 %v216
        %233 = vmatpush.msra.mxu0 %v200
        %234 = vmatpush.msra.mxu0 %v198
        %235 = vmatpush.msra.mxu0 %v196
        %236 = vmatpush.msra.mxu0 %v194
        %237 = vmatmul.f32.gmra.mxu0 %v212
        %v238 = vpop.f32.mrf.mxu0
        %v239 = vadd.f32 %v208, %v238
        %240 = vdwg.mxu0
        %241 = vmatpush.msra.mxu0 0.0
        %242 = vmatpush.msra.mxu0 0.0
        %243 = vmatpush.msra.mxu0 0.0
        %244 = vmatpush.msra.mxu0 0.0
        %245 = vmatpush.msra.mxu0 0.0
        %246 = vmatpush.msra.mxu0 0.0
        %247 = vmatpush.msra.mxu0 0.0
        %248 = vmatpush.msra.mxu0 0.0
        %249 = vmatpush.msra.mxu0 0.0
        %250 = vmatpush.msra.mxu0 0.0
        %251 = vmatpush.msra.mxu0 0.0
        %252 = vmatpush.msra.mxu0 %v219
        %253 = vmatpush.msra.mxu0 %v201
        %254 = vmatpush.msra.mxu0 %v199
        %255 = vmatpush.msra.mxu0 %v197
        %256 = vmatpush.msra.mxu0 %v195
        %257 = vmatmul.f32.gmra.mxu0 %v212
        %v258 = vpop.f32.mrf.mxu0
        %v259 = vadd.f32 %v208, %v258
        %260 = vdwg.mxu0
        %v261 = vsub.f32 0.0, %v239
        %v262 = vsub.f32 0.0, %v259
        %v263 = vmul.f32 %v261, 1.442695
        %v264 = vpow.pop %v263
        %v265 = vmul.f32 %v262, 1.442695
        %v266 = vpow.pop %v265
        %v267 = vadd.f32 %v264, 1.0
        %v268 = vadd.f32 %v266, 1.0
        %v269 = vrcp.pop %v267
        %v270 = vmul.f32 %v267, %v269
        %v271 = vsub.f32 1.0, %v270
        %v272 = vmul.f32 %v269, %v271
        %v273 = vadd.f32 %v269, %v272
        %vm274 = vweird.f32 %v267
        %vm275 = vweird.f32 %v269
        %vm276 = vmor %vm274, %vm275
        %v277 = vsel %vm276, %v269, %v273
        %v278 = vand.u32 2147483647, %v267
        %vm279 = vcmp.eq.f32.partialorder %v278, 8.507059e+37
        %v280 = vand.u32 %v267, 2147483648
        %v281 = vor.u32 1.1754944e-38, %v280
        %v282 = vsel %vm279, %v281, %v277
        %v283 = vmul.f32 1.0, %v282
        %v284 = vrcp.pop %v268
        %v285 = vmul.f32 %v268, %v284
        %v286 = vsub.f32 1.0, %v285
        %v287 = vmul.f32 %v284, %v286
        %v288 = vadd.f32 %v284, %v287
        %vm289 = vweird.f32 %v268
        %vm290 = vweird.f32 %v284
        %vm291 = vmor %vm289, %vm290
        %v292 = vsel %vm291, %v284, %v288
        %v293 = vand.u32 2147483647, %v268
        %vm294 = vcmp.eq.f32.partialorder %v293, 8.507059e+37
        %v295 = vand.u32 %v268, 2147483648
        %v296 = vor.u32 1.1754944e-38, %v295
        %v297 = vsel %vm294, %v296, %v292
        %v298 = vmul.f32 1.0, %v297
        %v299 = vmul.f32 %v239, %v283
        %v300 = vmul.f32 %v259, %v298
        %301 = vst [vmem:[%s190] sm:$0xff] %v299
        %302 = vst [vmem:[%s190 + $0x8] sm:$0xff] %v300
        %s303 = sand.u32 %s96, 1
        %s304 = scalar_lea.sflag [#allocation4], %s303
        %s305 = sand.u32 %s96, 1
        %s306 = smul.addr %s305, 16
        %s307 = scalar_lea.vmem [#allocation5], %s306
        // Predicated region
        $region37: #{tpu_custom_call.1} parent=31 // pred_check
          %p308 = pneg %p106
        $region38: #{tpu_custom_call.1} parent=31 // pred_check_branch
          %310 = sbr.rel (%p308) target = $region40
        $region39: #{tpu_custom_call.1} parent=31 // pred_region
          %s311 = smul.u32 2, %s20
          %313 = vsyncadd %s304, 0
          %s314 = smul.addr %s311, 8
          %s315 = scalar_lea.hbm %s3, %s314
          %s317 = sshll.u32 %s307, 4
          %s318 = int_to_ptr.vmem [resolvable:$true] %s317
          %s319 = sshll.u32 %s315, 4
          %s320 = int_to_ptr.hbm [resolvable:$true] %s319
          %322 = dma.vmem_to_hbm [thread:$0]  %s318, 256, %s320, %s304
        $region40: #{tpu_custom_call.1} parent=31 // pred_fallthru
          _
      $region32: #{tpu_custom_call.1} parent=5 // pred_fallthru
        _
      %p323 = scmp.le.s32.totalorder 2, %s15
      // Predicated region
      $region41: #{tpu_custom_call.1} parent=5 // pred_check
        %p324 = pneg %p323
      $region42: #{tpu_custom_call.1} parent=5 // pred_check_branch
        %326 = sbr.rel (%p324) target = $region44
      $region43: #{tpu_custom_call.1} parent=5 // pred_region
        %s327 = ssub.s32 %s15, 2
        // Predicated region
        $region45: #{tpu_custom_call.1} parent=43 // pred_check
          %p328 = pneg %p112
        $region46: #{tpu_custom_call.1} parent=43 // pred_check_branch
          %330 = sbr.rel (%p328) target = $region48
        $region47: #{tpu_custom_call.1} parent=43 // pred_region
          %s331 = sand.u32 %s97, 1
          %s332 = scalar_lea.sflag [#allocation4], %s331
          %s333 = sand.u32 %s97, 1
          %s334 = smul.addr %s333, 16
          %s335 = scalar_lea.vmem [#allocation5], %s334
          %337 = dma.done %s332, 256
        $region48: #{tpu_custom_call.1} parent=43 // pred_fallthru
          _
      $region44: #{tpu_custom_call.1} parent=5 // pred_fallthru
        _
    $region6: #{tpu_custom_call.1} parent=1 // loop_footer
      %s19 = sadd.s32 1, %s15
    $region7: #{tpu_custom_call.1} parent=1 // loop_footer_branch
      %14 = sbr.rel target = $region3
    $region8: #{tpu_custom_call.1} parent=1 // loop_exit
      _
    %338 = vsyncpa [#allocation3], 1
    %s339 = scalar_lea.sflag [#allocation3], 1
    %340 = vsyncpa %s339, 1
    %341 = vsyncpa [#allocation4], 1
    %s342 = scalar_lea.sflag [#allocation4], 1
    %343 = vsyncpa %s342, 1

</llo_original>
